<compile_context>
chip_gen: v7x
topology: tpu7x:2x2x1
jax: 0.10.0
libtpu: 0.0.40
codegen_flags: <defaults>
</compile_context>

<pallas_src>
import functools

import jax
import jax.numpy as jnp
from jax.experimental import pallas as pl
from jax.experimental.pallas import tpu as pltpu


def _round_up(x, m):
    return ((x + m - 1) // m) * m


def _self_expression_kernel(coef_ref, x_ref, o_ref, p_ref, *, tn, x_resident):
    # coef_ref : (tm, k)              f32   tile of Coefficient rows (same for all j)
    # x_ref    : (k, d_pad) or (k,tn) bf16  resident x, or a per-(i,j) column tile
    # o_ref    : (tm, tn)             out   output tile
    # p_ref    : (tm, k)              f32   scratch: softmax(coef) cached across j
    j = pl.program_id(1)

    @pl.when(j == 0)
    def _():
        c = coef_ref[...]
        m = jnp.max(c, axis=-1, keepdims=True)
        e = jnp.exp(c - m)
        denom = jnp.sum(e, axis=-1, keepdims=True)
        # approx reciprocal lowers to the EUP slot; error << bf16 operand error
        p_ref[...] = e * pl.reciprocal(denom, approx=True)

    if x_resident:
        start = pl.multiple_of(j * tn, 128)
        x_tile = x_ref[:, pl.ds(start, tn)]
    else:
        x_tile = x_ref[...]

    # MXU matmul with bf16 operands, f32 accumulation: (tm, k) @ (k, tn)
    o_ref[...] = jnp.dot(
        p_ref[...].astype(x_tile.dtype), x_tile,
        preferred_element_type=jnp.float32,
    ).astype(o_ref.dtype)


@functools.partial(jax.jit, static_argnames=("tm", "tn", "out_dtype"))
def self_expression_forward(coefficient, x, *, tm=256, tn=512,
                            out_dtype=jnp.float32):
    """y = softmax(coefficient, axis=1) @ x  (bf16 MXU operands, f32 accumulation)."""
    n, k = coefficient.shape
    k2, d = x.shape
    assert k == k2, "Coefficient cols must match x rows"

    # --- Row tile: multiple of 8, never larger than (padded) n. --------------
    tm_eff = _round_up(min(tm, _round_up(n, 8)), 8)
    n_pad = _round_up(n, tm_eff)
    # Ensure the parallel i axis has >= 2 blocks so both v7x TensorCores get
    # work (when n allows).  Never split the j axis for this (softmax gate).
    while n_pad // tm_eff < 2 and tm_eff > 8:
        tm_eff = max(8, _round_up(tm_eff // 2, 8))
        n_pad = _round_up(n, tm_eff)

    # --- Column tile: multiple of 128 (unmasked lane-dense stores). ----------
    tn_eff = _round_up(min(tn, _round_up(d, 128)), 128)
    d_pad = _round_up(d, tn_eff)

    # --- x residency: keep all of x in VMEM when the (double-buffered) bf16
    # block fits comfortably (safe across v5e/v6e/v7x).  Pallas skips re-DMA
    # for a constant block index, so x is fetched from HBM exactly once.
    x_resident = (2 * k * d_pad * 2) <= (16 << 20)

    coef_p = coefficient.astype(jnp.float32)
    if n_pad != n:
        coef_p = jnp.pad(coef_p, ((0, n_pad - n), (0, 0)))

    # Cast x to bf16 once here (not per grid step inside the kernel).
    x_bf16 = x.astype(jnp.bfloat16)
    if d_pad != d:
        x_bf16 = jnp.pad(x_bf16, ((0, 0), (0, d_pad - d)))

    grid = (n_pad // tm_eff, d_pad // tn_eff)

    out_itemsize = jnp.dtype(out_dtype).itemsize
    x_block_bytes = (k * d_pad if x_resident else k * tn_eff) * 2

    # VMEM budget (double-buffered blocks + f32 softmax scratch).  Cap at
    # 48 MiB: leaves headroom under v7x's 64 MiB physical VMEM.
    vmem_need = (
        2 * tm_eff * k * 4               # Coefficient tile (f32, 2 buffers)
        + 2 * x_block_bytes              # x block (bf16, 2 buffers)
        + 2 * tm_eff * tn_eff * out_itemsize  # output tile (2 buffers)
        + tm_eff * k * 4                 # softmax scratch (f32)
    )
    vmem_limit = min(max(32 << 20, int(vmem_need * 2)), 48 << 20)

    # Honest byte count: x is read once if resident, else once per row tile.
    x_reads = 1 if x_resident else (n_pad // tm_eff)
    cost = pl.CostEstimate(
        flops=2 * n_pad * k * d_pad,
        transcendentals=n_pad * k,
        bytes_accessed=(4 * n_pad * k
                        + 2 * k * d_pad * x_reads
                        + out_itemsize * n_pad * d_pad),
    )

    if x_resident:
        x_spec = pl.BlockSpec((k, d_pad), lambda i, j: (0, 0))
    else:
        x_spec = pl.BlockSpec((k, tn_eff), lambda i, j: (0, j))

    kernel = functools.partial(
        _self_expression_kernel, tn=tn_eff, x_resident=x_resident)

    out = pl.pallas_call(
        kernel,
        out_shape=jax.ShapeDtypeStruct((n_pad, d_pad), out_dtype),
        grid_spec=pltpu.PrefetchScalarGridSpec(
            num_scalar_prefetch=0,
            grid=grid,
            in_specs=[
                # Coefficient row tile: full k (softmax axis), same tile for all j.
                pl.BlockSpec((tm_eff, k), lambda i, j: (i, 0)),
                x_spec,
            ],
            out_specs=pl.BlockSpec((tm_eff, tn_eff), lambda i, j: (i, j)),
            scratch_shapes=[pltpu.VMEM((tm_eff, k), jnp.float32)],
        ),
        compiler_params=pltpu.CompilerParams(
            # j must remain "arbitrary" (sequential): p_ref is only written at
            # j == 0.  i is safely parallel (p_ref is refreshed at j == 0 of
            # every row tile).
            dimension_semantics=("parallel", "arbitrary"),
            vmem_limit_bytes=vmem_limit,
        ),
        cost_estimate=cost,
    )(coef_p, x_bf16)

    # Padded Coefficient rows produce garbage output rows -> always slice.
    return out[:n, :d]


def reference(coefficient, x):
    p = jax.nn.softmax(coefficient, axis=1)
    return p @ x


if __name__ == "__main__":
    # Small shapes consistent with the module: n nodes, kmeansNum clusters,
    # x is (kmeansNum, d) features.
    n, kmeansNum, d = 16, 32, 128

    # Deterministic parameter init, matching nn.Parameter(1.0 * torch.ones(...)).
    # TODO(synk): parameter learning / autograd is handled outside this kernel.
    coefficient = jnp.ones((n, kmeansNum), dtype=jnp.float32)

    # Deterministic example input.
    key = jax.random.PRNGKey(0)
    x = jax.random.normal(key, (kmeansNum, d), dtype=jnp.float32)

    y = self_expression_forward(coefficient, x)
    y = jax.block_until_ready(y)

    y_ref = reference(coefficient, x)
    assert y.shape == (n, d)
    # bf16 MXU operands + approx reciprocal -> slightly looser tolerance than f32.
    assert jnp.allclose(y, y_ref, atol=2e-2, rtol=2e-2), "mismatch vs reference"

    print("KERNEL_OK")
</pallas_src>

<mosaic_0001>
module attributes {stable_mosaic.version = 11 : i64} {
  func.func @_self_expression_kernel(%arg0: i32, %arg1: i32, %arg2: memref<8x32xf32, #tpu.memory_space<vmem>>, %arg3: memref<32x128xbf16, #tpu.memory_space<vmem>>, %arg4: memref<8x128xf32, #tpu.memory_space<vmem>>, %arg5: memref<8x32xf32, #tpu.memory_space<vmem>>) attributes {dimension_semantics = [#tpu.dimension_semantics<parallel>, #tpu.dimension_semantics<arbitrary>], iteration_bounds = array<i64: 2, 1>, scalar_prefetch = 0 : i64, scratch_operands = 1 : i64, tpu.core_type = #tpu.core_type<tc>, window_params = [{transform_indices = @transform_0, window_bounds = array<i64: 8, 32>}, {pipeline_mode = #tpu.pipeline_mode<synchronous>, transform_indices = @transform_1, window_bounds = array<i64: 32, 128>}, {transform_indices = @transform_2, window_bounds = array<i64: 8, 128>}]} {
    %c0_i32 = arith.constant 0 : i32
    %0 = arith.cmpi eq, %arg1, %c0_i32 : i32
    %1 = arith.extui %0 : i1 to i32
    %c0_i32_0 = arith.constant 0 : i32
    %2 = arith.cmpi ne, %1, %c0_i32_0 : i32
    scf.if %2 {
      %c0_5 = arith.constant 0 : index
      %c0_6 = arith.constant 0 : index
      %11 = vector.load %arg2[%c0_5, %c0_6] : memref<8x32xf32, #tpu.memory_space<vmem>>, vector<8x32xf32>
      %cst_7 = arith.constant dense<0xFF800000> : vector<8xf32>
      %12 = vector.multi_reduction <maximumf>, %11, %cst_7 [1] : vector<8x32xf32> to vector<8xf32>
      %13 = vector.shape_cast %12 : vector<8xf32> to vector<8x1xf32>
      %14 = vector.broadcast %13 : vector<8x1xf32> to vector<8x32xf32>
      %15 = arith.subf %11, %14 : vector<8x32xf32>
      %16 = math.exp %15 : vector<8x32xf32>
      %cst_8 = arith.constant dense<0.000000e+00> : vector<8xf32>
      %17 = vector.multi_reduction <add>, %16, %cst_8 [1] : vector<8x32xf32> to vector<8xf32>
      %18 = vector.shape_cast %17 : vector<8xf32> to vector<8x1xf32>
      %19 = tpu.reciprocal %18 {approx = true} : vector<8x1xf32> -> vector<8x1xf32>
      %20 = vector.broadcast %19 : vector<8x1xf32> to vector<8x32xf32>
      %21 = arith.mulf %16, %20 : vector<8x32xf32>
      %c0_9 = arith.constant 0 : index
      %c0_10 = arith.constant 0 : index
      %22 = vector.load %arg5[%c0_9, %c0_10] : memref<8x32xf32, #tpu.memory_space<vmem>>, vector<8x32xf32>
      tpu.vector_store %arg5[%c0_9, %c0_10], %21 {strides = array<i32>} : memref<8x32xf32, #tpu.memory_space<vmem>>, vector<8x32xf32>,
    } else {
    }
    %c128_i32 = arith.constant 128 : i32
    %3 = arith.muli %arg1, %c128_i32 : i32
    %4 = tpu.assume_multiple %3, 128 : i32
    %c0 = arith.constant 0 : index
    %5 = arith.index_cast %4 : i32 to index
    %6 = vector.load %arg3[%c0, %5] : memref<32x128xbf16, #tpu.memory_space<vmem>>, vector<32x128xbf16>
    %c0_1 = arith.constant 0 : index
    %c0_2 = arith.constant 0 : index
    %7 = vector.load %arg5[%c0_1, %c0_2] : memref<8x32xf32, #tpu.memory_space<vmem>>, vector<8x32xf32>
    %8 = arith.truncf %7 : vector<8x32xf32> to vector<8x32xbf16>
    %cst = arith.constant dense<0.000000e+00> : vector<8x128xf32>
    %9 = tpu.matmul %8, %6, %cst {dimension_numbers = #tpu.dot_dimension_numbers<[1], [0], [0], [1], [0, 0, 1, 1], [], []>} : vector<8x32xbf16>, vector<32x128xbf16>, vector<8x128xf32> -> vector<8x128xf32>
    %c0_3 = arith.constant 0 : index
    %c0_4 = arith.constant 0 : index
    %10 = vector.load %arg4[%c0_3, %c0_4] : memref<8x128xf32, #tpu.memory_space<vmem>>, vector<8x128xf32>
    tpu.vector_store %arg4[%c0_3, %c0_4], %9 {strides = array<i32>} : memref<8x128xf32, #tpu.memory_space<vmem>>, vector<8x128xf32>,
    return
  }
  func.func @transform_0(%arg0: i32, %arg1: i32) -> (i32, i32) {
    %c0_i32 = arith.constant 0 : i32
    %c0_i32_0 = arith.constant 0 : i32
    return %arg0, %c0_i32 : i32, i32
  }
  func.func @transform_1(%arg0: i32, %arg1: i32) -> (i32, i32) {
    %c0_i32 = arith.constant 0 : i32
    %c0_i32_0 = arith.constant 0 : i32
    %c0_i32_1 = arith.constant 0 : i32
    return %c0_i32, %c0_i32_0 : i32, i32
  }
  func.func @transform_2(%arg0: i32, %arg1: i32) -> (i32, i32) {
    %c0_i32 = arith.constant 0 : i32
    return %arg0, %arg1 : i32, i32
  }
}

</mosaic_0001>

<llo_original>
// kernel: self_expression_forward.1
$region0: #{self_expression_forward.1}
  #allocation0 [shape = 'u32[]', space=smem, size = 0x4, offset = 0x4, fixed_abs, tag = 'smem constant byte address 0x4 - core index']
  #allocation1 [shape = 'u32[144,128]{1,0:T(1,128)}', space=vmem, size = 0x12000, scoped, tag = 'internal scratch']
  #allocation2 [shape = 'f32[8,32]{1,0:T(8,128)}', space=vmem, size = 0x1000, scoped, tag = 'scratch operand']
  %s0 = inlined_call_operand.vmem [shape: f32[16,32], index: 0, kind: input, shape index: {}]
  %s1 = inlined_call_operand.vmem [shape: bf16[32,128], index: 1, kind: input, shape index: {}]
  %s2 = inlined_call_operand.hbm [shape: f32[16,128], index: 2, kind: output, shape index: {}]
  %s3 = sld [smem:[#allocation0]]
  $region45: #{self_expression_forward.1} parent=0
    _
  %s5 = ssub.s32 1, %s3
  %s6 = scalar_select 0, %s5, %s3
  $region1: #{self_expression_forward.1} parent=0
    #allocation3 [shape = 'u8[8192]{0}', space=vmem, size = 0x2000, scoped, tag = 'output window, operand 0']
    #allocation4 [shape = 's32[2]{0}', space=sflag, size = 0x8, scoped, tag = 'scoped memory for self_expression_forward.1']
    %7 = vsyncpa [#allocation4], 0
    %s8 = scalar_lea.sflag [#allocation4], 1
    %9 = vsyncpa %s8, 0
    loop: start=0, step=1, limit=4
    $region2: #{self_expression_forward.1} parent=1 // loop_pre_header
      _
    $region3: #{self_expression_forward.1} parent=1 // loop_header
      %s11 = sphi 0, %s15
      %p12 = scmp.ge.s32.totalorder %s11, 4
      %s18 = sphi 0, %s30
      %s19 = sphi 0, %s26
      %s20 = sphi 0, %s18
      %s21 = sphi 0, %s19
      %s22 = sphi 0, %s20
      %s23 = sphi 0, %s21
      %s33 = sphi 0, %s35
      %s36 = sphi 0, %s33
      %s37 = sphi 0, %s36
      %s53 = sphi 0, %s37
      %s57 = sphi 0, %s57
      %s59 = sphi 0, %s57
      %s60 = sphi 0, %s59
      %s74 = sphi 0, %s60
      %s82 = sphi 0, %s84
      %s85 = sphi 0, %s82
      %s86 = sphi 0, %s85
      %s102 = sphi 0, %s86
    $region4: #{self_expression_forward.1} parent=1 // loop_header_branch
      %14 = sbr.rel (%p12) target = $region8
    $region5: #{self_expression_forward.1} parent=1 // loop_body
      %s16 = ssub.s32 %s11, 1
      %s17 = ssub.s32 %s11, 2
      %s24 = sadd.s32 1, %s19
      %p25 = scmp.ge.s32.totalorder %s24, 1
      %s26 = scalar_select %p25, 0, %s24
      %s27 = sadd.s32 1, %s18
      %s28 = scalar_select %p25, %s27, %s18
      %p29 = scmp.ge.s32.totalorder %s28, 2
      %s30 = scalar_select %p29, 0, %s28
      %s31 = ssub.s32 %s18, %s30
      %p32 = scmp.eq.s32.totalorder %s31, 0
      %s34 = sadd.s32 %s33, 1
      %s35 = scalar_select %p32, %s33, %s34
      %p38 = pneg %p32
      %p39 = scmp.eq.s32.totalorder %s11, 1
      %p40 = por %p38, %p39
      %p41 = scmp.ne.s32.totalorder %s33, %s36
      %p42 = scmp.eq.s32.totalorder %s11, 0
      %p43 = por %p41, %p42
      %p44 = scmp.ne.s32.totalorder %s33, %s36
      %p45 = scmp.eq.s32.totalorder %s16, 1
      %p46 = por %p44, %p45
      %p47 = scmp.ne.s32.totalorder %s36, %s37
      %p48 = scmp.eq.s32.totalorder %s16, 0
      %p49 = por %p47, %p48
      %p50 = scmp.ne.s32.totalorder %s36, %s37
      %p51 = scmp.eq.s32.totalorder %s17, 1
      %p52 = por %p50, %p51
      %p54 = scmp.ne.s32.totalorder %s37, %s53
      %p55 = scmp.eq.s32.totalorder %s17, 0
      %p56 = por %p54, %p55
      %s58 = sadd.s32 %s57, 1
      %p61 = scmp.eq.s32.totalorder %s11, 1
      %p62 = scmp.ne.s32.totalorder %s57, %s59
      %p63 = scmp.eq.s32.totalorder %s11, 0
      %p64 = por %p62, %p63
      %p65 = scmp.ne.s32.totalorder %s57, %s59
      %p66 = scmp.eq.s32.totalorder %s16, 1
      %p67 = por %p65, %p66
      %p68 = scmp.ne.s32.totalorder %s59, %s60
      %p69 = scmp.eq.s32.totalorder %s16, 0
      %p70 = por %p68, %p69
      %p71 = scmp.ne.s32.totalorder %s59, %s60
      %p72 = scmp.eq.s32.totalorder %s17, 1
      %p73 = por %p71, %p72
      %p75 = scmp.ne.s32.totalorder %s60, %s74
      %p76 = scmp.eq.s32.totalorder %s17, 0
      %p77 = por %p75, %p76
      %s78 = ssub.s32 %s18, %s30
      %s79 = ssub.s32 %s19, %s26
      %s80 = sor.u32 %s78, %s79
      %p81 = scmp.eq.s32.totalorder %s80, 0
      %s83 = sadd.s32 %s82, 1
      %s84 = scalar_select %p81, %s82, %s83
      %p87 = pneg %p81
      %p88 = scmp.eq.s32.totalorder %s11, 1
      %p89 = por %p87, %p88
      %p90 = scmp.ne.s32.totalorder %s82, %s85
      %p91 = scmp.eq.s32.totalorder %s11, 0
      %p92 = por %p90, %p91
      %p93 = scmp.ne.s32.totalorder %s82, %s85
      %p94 = scmp.eq.s32.totalorder %s16, 1
      %p95 = por %p93, %p94
      %p96 = scmp.ne.s32.totalorder %s85, %s86
      %p97 = scmp.eq.s32.totalorder %s16, 0
      %p98 = por %p96, %p97
      %p99 = scmp.ne.s32.totalorder %s85, %s86
      %p100 = scmp.eq.s32.totalorder %s17, 1
      %p101 = por %p99, %p100
      %p103 = scmp.ne.s32.totalorder %s86, %s102
      %p104 = scmp.eq.s32.totalorder %s17, 0
      %p105 = por %p103, %p104
      %p106 = scmp.le.s32.totalorder 1, %s11
      %p107 = scmp.lt.s32.totalorder %s11, 3
      %p108 = pnand %p106, %p107
      %p109 = pneg %p108
      // Predicated region
      $region9: #{self_expression_forward.1} parent=5 // pred_check
        _
      $region10: #{self_expression_forward.1} parent=5 // pred_check_branch
        %111 = sbr.rel (%p108) target = $region12
      $region11: #{self_expression_forward.1} parent=5 // pred_region
        %s112 = ssub.s32 %s11, 1
        // Predicated region
        $region13: #{self_expression_forward.1} parent=11 // pred_check
          %p113 = pneg %p70
        $region14: #{self_expression_forward.1} parent=11 // pred_check_branch
          %115 = sbr.rel (%p113) target = $region16
        $region15: #{self_expression_forward.1} parent=11 // pred_region
          _
        $region16: #{self_expression_forward.1} parent=11 // pred_fallthru
          _
      $region12: #{self_expression_forward.1} parent=5 // pred_fallthru
        _
      %p116 = scmp.lt.s32.totalorder %s11, 2
      // Predicated region
      $region17: #{self_expression_forward.1} parent=5 // pred_check
        %p117 = pneg %p116
      $region18: #{self_expression_forward.1} parent=5 // pred_check_branch
        %119 = sbr.rel (%p117) target = $region20
      $region19: #{self_expression_forward.1} parent=5 // pred_region
        // Predicated region
        $region21: #{self_expression_forward.1} parent=19 // pred_check
          %p120 = pneg %p43
        $region22: #{self_expression_forward.1} parent=19 // pred_check_branch
          %122 = sbr.rel (%p120) target = $region24
        $region23: #{self_expression_forward.1} parent=19 // pred_region
          %p123 = scmp.lt.s32.totalorder %s18, 1
          %s124 = scalar_select %p123, %s18, 1
          %s125 = smul.addr %s124, 8
          %s126 = scalar_lea.vmem %s0, %s125
        $region24: #{self_expression_forward.1} parent=19 // pred_fallthru
          _
      $region20: #{self_expression_forward.1} parent=5 // pred_fallthru
        _
      %p127 = scmp.le.s32.totalorder 1, %s11
      %p128 = scmp.lt.s32.totalorder %s11, 3
      %p129 = pnand %p127, %p128
      %p130 = pneg %p129
      // Predicated region
      $region25: #{self_expression_forward.1} parent=5 // pred_check
        _
      $region26: #{self_expression_forward.1} parent=5 // pred_check_branch
        %132 = sbr.rel (%p129) target = $region28
      $region27: #{self_expression_forward.1} parent=5 // pred_region
        %s133 = ssub.s32 %s11, 1
        %p134 = scmp.lt.s32.totalorder %s20, 1
        %s135 = scalar_select %p134, %s20, 1
        %s136 = smul.addr %s135, 8
        %s137 = scalar_lea.vmem %s0, %s136
        %p138 = pneg %p49
        %p139 = pneg %p46
        %p140 = pneg %p70
        %p141 = pneg %p67
        %p142 = pneg %p98
        %p143 = pneg %p95
        %s144 = sand.u32 %s85, 1
        %s145 = scalar_lea.sflag [#allocation4], %s144
        %s146 = sand.u32 %s85, 1
        %s147 = smul.addr %s146, 8
        %s148 = scalar_lea.vmem [#allocation3], %s147
        %p149 = scmp.lt.s32.totalorder %s20, 1
        %s150 = scalar_select %p149, %s20, 1
        %s151 = smul.addr %s150, 8
        %s152 = scalar_lea.vmem %s0, %s151
        %p154 = scmp.eq.s32.totalorder %s21, 0
        // Predicated region
        $region29: #{self_expression_forward.1} parent=27 // pred_check
          %p155 = pneg %p154
        $region30: #{self_expression_forward.1} parent=27 // pred_check_branch
          %157 = sbr.rel (%p155) target = $region32
        $region31: #{self_expression_forward.1} parent=27 // pred_region
          %v158 = vld [vmem:[%s152] sm:$0xff]
          %vm159 = vcmask 261120
          %v160 = vsel %vm159, %v158, -inf
          %161 = vmax.xlane.f32.xlu0 %v160
          %v162 = vpop.xlane.xlu0 %161
          %v163 = vsub.f32 %v158, %v162
          %v164 = vmul.f32 %v163, 1.442695
          %v165 = vpow.pop %v164
          %v166 = vsel %vm159, %v165, 0.0
          %167 = vadd.xlane.f32.xlu0 %v166
          %v168 = vpop.xlane.xlu0 %167
          %v169 = vrcp.pop %v168
          %v170 = vmul.f32 %v165, %v169
          %171 = vst.msk [vmem:[#allocation2] sm:$0xff] %vm159, %v170
        $region32: #{self_expression_forward.1} parent=27 // pred_fallthru
          _
        %s172 = smul.u32 %s21, 128
        %s173 = sshra.s32 %s172, 7
        %s174 = sand.u32 %s172, 127
        %s175 = smul.addr %s173, 4
        %s176 = scalar_lea.vmem %s1, %s175
        %v177 = vld [vmem:[%s176] sm:$0xf]
        %v178 = vld [vmem:[%s176 + $0x4] sm:$0xf]
        %v179 = vld [vmem:[%s176 + $0x8] sm:$0xf]
        %v180 = vld [vmem:[%s176 + $0xc] sm:$0xf]
        %v181 = vld [vmem:[#allocation2] sm:$0xff]
        %v182 = vpack.c.bf16 %v181, %v181
        %v187 = vunpack.c.l.b16 %v177
        %v188 = vunpack.c.l.b16 %v178
        %v189 = vunpack.c.l.b16 %v179
        %v190 = vunpack.c.l.b16 %v180
        %v191 = vpack.c.b16 %v188, %v187
        %v192 = vpack.c.b16 %v190, %v189
        %vm195 = vcmask 261120
        %v197 = vsel %vm195, %v182, 0
        %199 = vmatprep.subr.bf16.mxu0 0
        %200 = vmatpush1.bf16.msra.mxu0 %v191
        %201 = vmatprep.subr.bf16.mxu0 0
        %202 = vmatpush1.bf16.msra.mxu0 %v192
        %203 = vmatprep.subr.bf16.mxu0 0
        %204 = vmatpush1.bf16.msra.mxu0 0
        %205 = vmatprep.subr.bf16.mxu0 0
        %206 = vmatpush1.bf16.msra.mxu0 0
        %207 = vmatprep.subr.bf16.mxu0 0
        %208 = vmatpush1.bf16.msra.mxu0 0
        %209 = vmatprep.subr.bf16.mxu0 0
        %210 = vmatpush1.bf16.msra.mxu0 0
        %211 = vmatprep.subr.bf16.mxu0 0
        %212 = vmatpush1.bf16.msra.mxu0 0
        %213 = vmatprep.subr.bf16.mxu0 0
        %214 = vmatpush1.bf16.msra.mxu0 0
        %215 = vmatprep.subr.bf16.mxu0 0
        %216 = vmatpush1.bf16.msra.mxu0 0
        %217 = vmatprep.subr.bf16.mxu0 0
        %218 = vmatpush1.bf16.msra.mxu0 0
        %219 = vmatprep.subr.bf16.mxu0 0
        %220 = vmatpush1.bf16.msra.mxu0 0
        %221 = vmatprep.subr.bf16.mxu0 0
        %222 = vmatpush1.bf16.msra.mxu0 0
        %223 = vmatprep.subr.bf16.mxu0 0
        %224 = vmatpush1.bf16.msra.mxu0 0
        %225 = vmatprep.subr.bf16.mxu0 0
        %226 = vmatpush1.bf16.msra.mxu0 0
        %227 = vmatprep.subr.bf16.mxu0 0
        %228 = vmatpush1.bf16.msra.mxu0 0
        %229 = vmatprep.subr.bf16.mxu0 0
        %230 = vmatpush1.bf16.msra.mxu0 0
        %231 = vmatprep.mubr.bf16.mxu0 0
        %232 = vmatmul.mubr.bf16.gmra.mrb[0].mxu0 %v197
        %v233 = vpop.f32.mrb[0].mxu0
        %v234 = vadd.f32 0.0, %v233
        %v235 = vpop.f32.mrb[0].mxu0
        %v236 = vpop.f32.mrb[0].mxu0
        %v237 = vpop.f32.mrb[0].mxu0
        %238 = vdwg.mxu0
        %239 = vst [vmem:[%s148] sm:$0xff] %v234
        %s240 = sand.u32 %s85, 1
        %s241 = scalar_lea.sflag [#allocation4], %s240
        %s242 = sand.u32 %s85, 1
        %s243 = smul.addr %s242, 8
        %s244 = scalar_lea.vmem [#allocation3], %s243
        // Predicated region
        $region33: #{self_expression_forward.1} parent=27 // pred_check
          %p245 = pneg %p95
        $region34: #{self_expression_forward.1} parent=27 // pred_check_branch
          %247 = sbr.rel (%p245) target = $region36
        $region35: #{self_expression_forward.1} parent=27 // pred_region
          %s249 = ssub.s32 128, 128
          %250 = vsyncadd %s241, %s249
          %s251 = sadd.s32 %s21, %s20
          %s252 = smul.addr %s251, 128
          %s253 = scalar_lea.hbm %s2, %s252
          %s255 = sshll.u32 %s244, 4
          %s256 = int_to_ptr.vmem [resolvable:$true] %s255
          %258 = dma.vmem_to_hbm [thread:$0]  %s256, 128, %s253, %s241
        $region36: #{self_expression_forward.1} parent=27 // pred_fallthru
          _
      $region28: #{self_expression_forward.1} parent=5 // pred_fallthru
        _
      %p259 = scmp.le.s32.totalorder 2, %s11
      // Predicated region
      $region37: #{self_expression_forward.1} parent=5 // pred_check
        %p260 = pneg %p259
      $region38: #{self_expression_forward.1} parent=5 // pred_check_branch
        %262 = sbr.rel (%p260) target = $region40
      $region39: #{self_expression_forward.1} parent=5 // pred_region
        %s263 = ssub.s32 %s11, 2
        // Predicated region
        $region41: #{self_expression_forward.1} parent=39 // pred_check
          %p264 = pneg %p101
        $region42: #{self_expression_forward.1} parent=39 // pred_check_branch
          %266 = sbr.rel (%p264) target = $region44
        $region43: #{self_expression_forward.1} parent=39 // pred_region
          %s267 = sand.u32 %s86, 1
          %s268 = scalar_lea.sflag [#allocation4], %s267
          %s269 = sand.u32 %s86, 1
          %s270 = smul.addr %s269, 8
          %s271 = scalar_lea.vmem [#allocation3], %s270
          %272 = dma.done %s268, 128
        $region44: #{self_expression_forward.1} parent=39 // pred_fallthru
          _
      $region40: #{self_expression_forward.1} parent=5 // pred_fallthru
        _
    $region6: #{self_expression_forward.1} parent=1 // loop_footer
      %s15 = sadd.s32 1, %s11
    $region7: #{self_expression_forward.1} parent=1 // loop_footer_branch
      %10 = sbr.rel target = $region3
    $region8: #{self_expression_forward.1} parent=1 // loop_exit
      _
    %273 = vsyncpa [#allocation4], 1
    %s274 = scalar_lea.sflag [#allocation4], 1
    %275 = vsyncpa %s274, 1

</llo_original>
